<compile_context>
chip_gen: v5e
topology: v5e:2x2
jax: 0.10.0
libtpu: 0.0.40
codegen_flags: <defaults>
</compile_context>

<pallas_src>
import functools
import math

import jax
import jax.numpy as jnp
from jax.experimental import pallas as pl
from jax.experimental.pallas import tpu as pltpu

LRELU_SLOPE = 0.2
LRELU_GAIN = math.sqrt(2.0 / (1.0 + LRELU_SLOPE ** 2))


def _round_up(a, b):
    return ((a + b - 1) // b) * b


def _tpu_generation():
    try:
        kind = jax.devices()[0].device_kind.lower()
    except Exception:  # pragma: no cover - no devices
        return "unknown"
    if "v5 lite" in kind or "v5e" in kind or "v5lite" in kind:
        return "v5e"
    if "v6" in kind:
        return "v6e"
    if "v7" in kind:
        return "v7x"
    return "unknown"


# gen -> (mxu_m_multiple, default block_n, vmem_limit_bytes, resident-weight budget)
_GEN_CONFIG = {
    "v5e":     (128, 512, 100 * 1024 * 1024, 80 * 1024 * 1024),
    "v6e":     (256, 512, 100 * 1024 * 1024, 80 * 1024 * 1024),
    "v7x":     (256, 256, 48 * 1024 * 1024, 36 * 1024 * 1024),
    "unknown": (128, 256, 48 * 1024 * 1024, 36 * 1024 * 1024),
}


def _centered_linear_weight(w):
    """Linear(..., Centered=True): center along fan-in, MSR-scale by 1/sqrt(fan_in)."""
    fan_in = w.shape[1]
    w = w - jnp.mean(w, axis=1, keepdims=True)
    return w / jnp.sqrt(jnp.asarray(fan_in, jnp.float32))


# --------------------------------------------------------------------------- #
# Kernels
# --------------------------------------------------------------------------- #
def _head_kernel_resident(x_ref, gain_ref, w1_ref, w2_ref, out_ref,
                          *, compute_dtype, ew_dtype):
    """Whole-K-resident variant: one batch tile per grid step.

    x_ref   : (TN, K_pad)     flattened NCHW input (cast to bf16 in-kernel)
    gain_ref: (TN, 1)         per-sample gain (f32)
    w1_ref  : (K_pad, H_pad)  folded basis * centered LinearLayer1 weight (bf16)
    w2_ref  : (H_pad, O_pad)  centered LinearLayer2 weight * LRELU_GAIN (bf16)
    out_ref : (TN, O_pad)     f32
    """
    h = jnp.dot(x_ref[...].astype(compute_dtype), w1_ref[...],
                preferred_element_type=jnp.float32)                 # (TN, H_pad) f32
    # Per-sample gain + LeakyReLU (magnitude gain folded into w2). bf16 on v6e/v7x.
    h = h.astype(ew_dtype) * gain_ref[...].astype(ew_dtype)
    h = jnp.where(h >= 0, h, LRELU_SLOPE * h)
    out_ref[...] = jnp.dot(h.astype(compute_dtype), w2_ref[...],
                           preferred_element_type=jnp.float32)


def _head_kernel_ktiled(x_ref, gain_ref, w1_ref, w2_ref, out_ref, acc_ref,
                        *, compute_dtype, ew_dtype):
    """K-tiled fallback: trailing 'arbitrary' K axis + f32 accumulator scratch."""
    kk = pl.program_id(1)

    @pl.when(kk == 0)
    def _init():
        acc_ref[...] = jnp.zeros_like(acc_ref)

    acc_ref[...] += jnp.dot(x_ref[...].astype(compute_dtype), w1_ref[...],
                            preferred_element_type=jnp.float32)

    @pl.when(kk == pl.num_programs(1) - 1)
    def _finalize():
        h = acc_ref[...].astype(ew_dtype) * gain_ref[...].astype(ew_dtype)
        h = jnp.where(h >= 0, h, LRELU_SLOPE * h)
        out_ref[...] = jnp.dot(h.astype(compute_dtype), w2_ref[...],
                               preferred_element_type=jnp.float32)


# --------------------------------------------------------------------------- #
# Host-side parameter preparation (one-time, hoisted out of the forward path)
# --------------------------------------------------------------------------- #
def prepare_params(params, *, compute_dtype=jnp.bfloat16):
    basis = params["basis"]
    c = basis.shape[0]
    wb = basis.reshape(c, 16).astype(jnp.float32)                          # (C, 16)
    w1_eff = _centered_linear_weight(params["w1"].astype(jnp.float32)).T  # (C, H)
    w2_eff = _centered_linear_weight(params["w2"].astype(jnp.float32)).T  # (H, O)
    hdim = w1_eff.shape[1]
    odim = w2_eff.shape[1]

    k = c * 16
    k_pad = _round_up(k, 128)
    h_pad = _round_up(hdim, 128)
    o_pad = _round_up(odim, 128)

    # Fold the depthwise basis conv into the first matmul:
    #   W_fold[c*16 + s, h] = wb[c, s] * W1_eff[c, h]
    w_fold = (wb[:, :, None] * w1_eff[:, None, :]).reshape(k, hdim)
    w_fold = jnp.pad(w_fold, ((0, k_pad - k), (0, h_pad - hdim))).astype(compute_dtype)
    # LeakyReLU's magnitude gain is a positive scalar applied after the piecewise
    # part, so folding it into w2 is exact and saves one VPU pass in the kernel.
    w2_p = jnp.pad(w2_eff * LRELU_GAIN,
                   ((0, h_pad - hdim), (0, o_pad - odim))).astype(compute_dtype)

    return {
        "w_fold": w_fold,            # (K_pad, H_pad) bf16
        "w2": w2_p,                  # (H_pad, O_pad) bf16
        "in_channels": c,
        "k_pad": k_pad,
        "h_pad": h_pad,
        "o_pad": o_pad,
        "out_dim": odim,
        "compute_dtype": compute_dtype,
    }


# --------------------------------------------------------------------------- #
# Forward wrapper
# --------------------------------------------------------------------------- #
def discriminative_head(x, gain, prepared, *, block_n=None, force_k_tile=None):
    """x: (N, C, 4, 4) NCHW, gain: (N,) -> (N, OutputDimension) float32."""
    n, c, hh, ww = x.shape
    assert hh == 4 and ww == 4, "DiscriminativeBasis expects a 4x4 feature map"
    assert c == prepared["in_channels"]

    gen = _tpu_generation()
    mxu_m, default_block_n, vmem_limit, weight_budget = _GEN_CONFIG[gen]
    if block_n is None:
        block_n = default_block_n
    compute_dtype = prepared["compute_dtype"]
    # Elementwise epilogue in bf16 on v6e/v7x (bf16 VPU), f32 on v5e/unknown.
    ew_dtype = jnp.bfloat16 if gen in ("v6e", "v7x") else jnp.float32

    k = c * 16
    k_pad = prepared["k_pad"]
    h_pad = prepared["h_pad"]
    o_pad = prepared["o_pad"]
    w_itemsize = jnp.dtype(compute_dtype).itemsize
    x_itemsize = x.dtype.itemsize

    # Batch tile: MXU-M multiple for large batches, multiple of 16 (bf16 sublane
    # packing) otherwise, hard floor 16.
    if n >= mxu_m:
        tn = min(_round_up(block_n, mxu_m), _round_up(n, mxu_m))
    else:
        tn = max(16, _round_up(n, 16))

    # Keep the whole folded weight resident when it fits the per-generation VMEM
    # budget (single-buffered); otherwise fall back to a K-tiled accumulation.
    weight_bytes = (k_pad * h_pad + h_pad * o_pad) * w_itemsize
    k_tile = force_k_tile
    if k_tile is None and weight_bytes > weight_budget:
        for cand in (512, 384, 256, 128):
            if k_pad % cand == 0:
                k_tile = cand
                break
    if k_tile is not None:
        assert k_pad % k_tile == 0

    def _vmem_estimate(tn_):
        kb = k_pad if k_tile is None else k_tile
        b = 2 * tn_ * kb * x_itemsize                       # x tile (double-buffered)
        b += (1 if k_tile is None else 2) * kb * h_pad * w_itemsize   # folded W1
        b += h_pad * o_pad * w_itemsize                     # W2 (single-buffered)
        b += 2 * tn_ * o_pad * 4                            # f32 output tile
        b += 2 * tn_ * 4                                    # gain
        if k_tile is not None:
            b += tn_ * h_pad * 4                            # f32 accumulator scratch
        return b

    while tn > 16 and _vmem_estimate(tn) > int(0.85 * vmem_limit):
        tn = max(16, _round_up(tn // 2, 16))
    n_pad = _round_up(n, tn)

    # x preprocessing: reshape is free; only pad (extra HBM pass) when unavoidable.
    # The bf16 cast happens inside the kernel, so no wrapper-side materialization.
    x_flat = x.reshape(n, k)
    if k_pad != k or n_pad != n:
        x_flat = jnp.pad(x_flat, ((0, n_pad - n), (0, k_pad - k)))
    gain_col = gain.reshape(n, 1).astype(jnp.float32)
    if n_pad != n:
        gain_col = jnp.pad(gain_col, ((0, n_pad - n), (0, 0)))

    cost = pl.CostEstimate(
        flops=2 * n_pad * (k_pad * h_pad + h_pad * o_pad),
        transcendentals=0,
        bytes_accessed=(n_pad * k_pad * x_itemsize + n_pad * 4
                        + weight_bytes + n_pad * o_pad * 4),
    )

    if k_tile is None:
        kernel = functools.partial(_head_kernel_resident,
                                   compute_dtype=compute_dtype, ew_dtype=ew_dtype)
        out = pl.pallas_call(
            kernel,
            out_shape=jax.ShapeDtypeStruct((n_pad, o_pad), jnp.float32),
            grid=(n_pad // tn,),
            in_specs=[
                pl.BlockSpec((tn, k_pad), lambda i: (i, 0)),          # x tile (pipelined)
                pl.BlockSpec((tn, 1), lambda i: (i, 0)),              # per-sample gain
                pl.BlockSpec((k_pad, h_pad), lambda i: (0, 0),        # folded W1, resident,
                             pipeline_mode=pl.Buffered(1)),           #   single-buffered
                pl.BlockSpec((h_pad, o_pad), lambda i: (0, 0),        # W2, resident,
                             pipeline_mode=pl.Buffered(1)),           #   single-buffered
            ],
            out_specs=pl.BlockSpec((tn, o_pad), lambda i: (i, 0)),
            compiler_params=pltpu.CompilerParams(
                dimension_semantics=("parallel",),
                vmem_limit_bytes=vmem_limit,
            ),
            cost_estimate=cost,
        )(x_flat, gain_col, prepared["w_fold"], prepared["w2"])
    else:
        kernel = functools.partial(_head_kernel_ktiled,
                                   compute_dtype=compute_dtype, ew_dtype=ew_dtype)
        out = pl.pallas_call(
            kernel,
            out_shape=jax.ShapeDtypeStruct((n_pad, o_pad), jnp.float32),
            grid=(n_pad // tn, k_pad // k_tile),
            in_specs=[
                pl.BlockSpec((tn, k_tile), lambda i, kk: (i, kk)),    # x tile
                pl.BlockSpec((tn, 1), lambda i, kk: (i, 0)),          # gain
                pl.BlockSpec((k_tile, h_pad), lambda i, kk: (kk, 0)), # W1 K-slab (pipelined)
                pl.BlockSpec((h_pad, o_pad), lambda i, kk: (0, 0),    # W2, resident
                             pipeline_mode=pl.Buffered(1)),
            ],
            out_specs=pl.BlockSpec((tn, o_pad), lambda i, kk: (i, 0)),
            scratch_shapes=[pltpu.VMEM((tn, h_pad), jnp.float32)],
            compiler_params=pltpu.CompilerParams(
                dimension_semantics=("parallel", "arbitrary"),
                vmem_limit_bytes=vmem_limit,
            ),
            cost_estimate=cost,
        )(x_flat, gain_col, prepared["w_fold"], prepared["w2"])

    # Strip batch / output-lane padding (padding rows/cols are exact zeros).
    return out[:n, :prepared["out_dim"]]


# --------------------------------------------------------------------------- #
# Test scaffolding
# --------------------------------------------------------------------------- #
def init_params(key, input_channels, output_dimension, hidden_dimension):
    k_basis, k_w1, k_w2 = jax.random.split(key, 3)
    # Depthwise conv weight (C, 1, 4, 4), MSR init: std = 1/sqrt(1*4*4).
    basis = jax.random.normal(k_basis, (input_channels, 1, 4, 4), jnp.float32) / 4.0
    # Raw Linear weights (Out, In) as in nn.Linear; centering/scaling applied in prep.
    w1 = jax.random.normal(k_w1, (hidden_dimension, input_channels), jnp.float32)
    w2 = jax.random.normal(k_w2, (output_dimension, hidden_dimension), jnp.float32)
    return {"basis": basis, "w1": w1, "w2": w2}


def reference_head(x, gain, params):
    """Pure-JAX f32 reference of the original forward pass."""
    n, c = x.shape[0], x.shape[1]
    wb = params["basis"].reshape(c, 16)
    basis = jnp.einsum("ncs,cs->nc", x.reshape(n, c, 16), wb) * gain[:, None]
    w1 = _centered_linear_weight(params["w1"])
    w2 = _centered_linear_weight(params["w2"])
    h = basis @ w1.T
    h = jnp.where(h >= 0, h, LRELU_SLOPE * h) * LRELU_GAIN
    return h @ w2.T


if __name__ == "__main__":
    key = jax.random.PRNGKey(0)
    k_x, k_g, k_p, k_x2, k_g2, k_p2 = jax.random.split(key, 6)

    # Case 1: resident-weight path (C*16 = 128 lanes -> no x padding pre-pass).
    N, C, HIDDEN, OUT = 2, 8, 32, 4
    x = jax.random.normal(k_x, (N, C, 4, 4), jnp.float32)
    gain = jax.random.uniform(k_g, (N,), jnp.float32, 0.5, 1.5)
    params = init_params(k_p, C, OUT, HIDDEN)
    prepared = prepare_params(params)

    out = jax.block_until_ready(discriminative_head(x, gain, prepared))
    assert out.shape == (N, OUT) and out.dtype == jnp.float32
    assert bool(jnp.all(jnp.isfinite(out)))
    ref = reference_head(x, gain, params)
    assert bool(jnp.allclose(out, ref, atol=5e-2, rtol=5e-2)), (
        f"resident path mismatch: max abs err {float(jnp.max(jnp.abs(out - ref)))}"
    )

    # Case 2: exercise the K-tiled accumulator fallback (used on v7x when the
    # folded weight no longer fits the VMEM budget).
    N2, C2, HIDDEN2, OUT2 = 4, 16, 64, 8
    x2 = jax.random.normal(k_x2, (N2, C2, 4, 4), jnp.float32)
    gain2 = jax.random.uniform(k_g2, (N2,), jnp.float32, 0.5, 1.5)
    params2 = init_params(k_p2, C2, OUT2, HIDDEN2)
    prepared2 = prepare_params(params2)

    out2 = jax.block_until_ready(
        discriminative_head(x2, gain2, prepared2, force_k_tile=128))
    ref2 = reference_head(x2, gain2, params2)
    assert out2.shape == (N2, OUT2)
    assert bool(jnp.allclose(out2, ref2, atol=5e-2, rtol=5e-2)), (
        f"k-tiled path mismatch: max abs err {float(jnp.max(jnp.abs(out2 - ref2)))}"
    )

    print("KERNEL_OK")
</pallas_src>

<mosaic_0001>
module attributes {stable_mosaic.version = 11 : i64} {
  func.func @_head_kernel_resident(%arg0: i32, %arg1: memref<16x128xf32, #tpu.memory_space<vmem>>, %arg2: memref<16x1xf32, #tpu.memory_space<vmem>>, %arg3: memref<128x128xbf16, #tpu.memory_space<vmem>>, %arg4: memref<128x128xbf16, #tpu.memory_space<vmem>>, %arg5: memref<16x128xf32, #tpu.memory_space<vmem>>) attributes {dimension_semantics = [#tpu.dimension_semantics<parallel>], iteration_bounds = array<i64: 1>, scalar_prefetch = 0 : i64, scratch_operands = 0 : i64, tpu.core_type = #tpu.core_type<tc>, window_params = [{transform_indices = @transform_0, window_bounds = array<i64: 16, 128>}, {transform_indices = @transform_1, window_bounds = array<i64: 16, 1>}, {pipeline_mode = #tpu.pipeline_mode<synchronous>, transform_indices = @transform_2, window_bounds = array<i64: 128, 128>}, {pipeline_mode = #tpu.pipeline_mode<synchronous>, transform_indices = @transform_3, window_bounds = array<i64: 128, 128>}, {transform_indices = @transform_4, window_bounds = array<i64: 16, 128>}]} {
    %c0 = arith.constant 0 : index
    %c0_0 = arith.constant 0 : index
    %0 = vector.load %arg1[%c0, %c0_0] : memref<16x128xf32, #tpu.memory_space<vmem>>, vector<16x128xf32>
    %1 = arith.truncf %0 : vector<16x128xf32> to vector<16x128xbf16>
    %c0_1 = arith.constant 0 : index
    %c0_2 = arith.constant 0 : index
    %2 = vector.load %arg3[%c0_1, %c0_2] : memref<128x128xbf16, #tpu.memory_space<vmem>>, vector<128x128xbf16>
    %cst = arith.constant dense<0.000000e+00> : vector<16x128xf32>
    %3 = tpu.matmul %1, %2, %cst {dimension_numbers = #tpu.dot_dimension_numbers<[1], [0], [0], [1], [0, 0, 1, 1], [], []>} : vector<16x128xbf16>, vector<128x128xbf16>, vector<16x128xf32> -> vector<16x128xf32>
    %c0_3 = arith.constant 0 : index
    %c0_4 = arith.constant 0 : index
    %4 = vector.load %arg2[%c0_3, %c0_4] : memref<16x1xf32, #tpu.memory_space<vmem>>, vector<16x1xf32>
    %5 = vector.broadcast %4 : vector<16x1xf32> to vector<16x128xf32>
    %6 = arith.mulf %3, %5 : vector<16x128xf32>
    %cst_5 = arith.constant 0.000000e+00 : f32
    %7 = vector.broadcast %cst_5 : f32 to vector<16x128xf32>
    %8 = arith.cmpf oge, %6, %7 : vector<16x128xf32>
    %cst_6 = arith.constant 2.000000e-01 : f32
    %9 = vector.broadcast %cst_6 : f32 to vector<16x128xf32>
    %10 = arith.mulf %9, %6 : vector<16x128xf32>
    %11 = arith.select %8, %6, %10 : vector<16x128xi1>, vector<16x128xf32>
    %12 = arith.truncf %11 : vector<16x128xf32> to vector<16x128xbf16>
    %c0_7 = arith.constant 0 : index
    %c0_8 = arith.constant 0 : index
    %13 = vector.load %arg4[%c0_7, %c0_8] : memref<128x128xbf16, #tpu.memory_space<vmem>>, vector<128x128xbf16>
    %cst_9 = arith.constant dense<0.000000e+00> : vector<16x128xf32>
    %14 = tpu.matmul %12, %13, %cst_9 {dimension_numbers = #tpu.dot_dimension_numbers<[1], [0], [0], [1], [0, 0, 1, 1], [], []>} : vector<16x128xbf16>, vector<128x128xbf16>, vector<16x128xf32> -> vector<16x128xf32>
    %c0_10 = arith.constant 0 : index
    %c0_11 = arith.constant 0 : index
    %15 = vector.load %arg5[%c0_10, %c0_11] : memref<16x128xf32, #tpu.memory_space<vmem>>, vector<16x128xf32>
    tpu.vector_store %arg5[%c0_10, %c0_11], %14 {strides = array<i32>} : memref<16x128xf32, #tpu.memory_space<vmem>>, vector<16x128xf32>,
    return
  }
  func.func @transform_0(%arg0: i32) -> (i32, i32) {
    %c0_i32 = arith.constant 0 : i32
    %c0_i32_0 = arith.constant 0 : i32
    return %arg0, %c0_i32 : i32, i32
  }
  func.func @transform_1(%arg0: i32) -> (i32, i32) {
    %c0_i32 = arith.constant 0 : i32
    %c0_i32_0 = arith.constant 0 : i32
    return %arg0, %c0_i32 : i32, i32
  }
  func.func @transform_2(%arg0: i32) -> (i32, i32) {
    %c0_i32 = arith.constant 0 : i32
    %c0_i32_0 = arith.constant 0 : i32
    %c0_i32_1 = arith.constant 0 : i32
    return %c0_i32, %c0_i32_0 : i32, i32
  }
  func.func @transform_3(%arg0: i32) -> (i32, i32) {
    %c0_i32 = arith.constant 0 : i32
    %c0_i32_0 = arith.constant 0 : i32
    %c0_i32_1 = arith.constant 0 : i32
    return %c0_i32, %c0_i32_0 : i32, i32
  }
  func.func @transform_4(%arg0: i32) -> (i32, i32) {
    %c0_i32 = arith.constant 0 : i32
    %c0_i32_0 = arith.constant 0 : i32
    return %arg0, %c0_i32 : i32, i32
  }
}

</mosaic_0001>

<llo_original>
// kernel: tpu_custom_call.1
$region0: #{tpu_custom_call.1}
  #allocation0 [shape = 'u32[]', space=smem, size = 0x4, offset = 0x4, fixed_abs, tag = 'smem constant byte address 0x4 - core index']
  #allocation1 [shape = 'u32[72,128]{1,0:T(1,128)}', space=vmem, size = 0x9000, scoped, tag = 'internal scratch']
  %s0 = inlined_call_operand.vmem [shape: f32[16,128], index: 0, kind: input, shape index: {}]
  %s1 = inlined_call_operand.vmem [shape: f32[16,1], index: 1, kind: input, shape index: {}]
  %s2 = inlined_call_operand.hbm [shape: bf16[128,128], index: 2, kind: input, shape index: {}]
  %s3 = inlined_call_operand.hbm [shape: bf16[128,128], index: 3, kind: input, shape index: {}]
  %s4 = inlined_call_operand.hbm [shape: f32[16,128], index: 4, kind: output, shape index: {}]
  %s5 = sld [smem:[#allocation0]]
  $region34: #{tpu_custom_call.1} parent=0
    _
  %s7 = ssub.s32 1, %s5
  %s8 = scalar_select 0, %s7, %s5
  $region1: #{tpu_custom_call.1} parent=0
    #allocation2 [shape = 'u8[32768]{0}', space=vmem, size = 0x8000, scoped, tag = 'input window, operand 2, single buffered']
    #allocation3 [shape = 's32[1]{0}', space=sflag, size = 0x4, scoped, tag = 'scoped memory for tpu_custom_call.1']
    #allocation4 [shape = 's32[1]{0}', space=sflag, size = 0x4, scoped, tag = 'scoped memory for tpu_custom_call.1']
    #allocation5 [shape = 'u8[32768]{0}', space=vmem, size = 0x8000, scoped, tag = 'input window, operand 3, single buffered']
    #allocation6 [shape = 's32[1]{0}', space=sflag, size = 0x4, scoped, tag = 'scoped memory for tpu_custom_call.1']
    #allocation7 [shape = 'u8[8192]{0}', space=vmem, size = 0x2000, scoped, tag = 'output window, operand 0, single buffered']
    %9 = vsyncpa [#allocation3], 0
    %10 = vsyncpa [#allocation6], 0
    %11 = vsyncpa [#allocation4], 0
    // Predicated region
    $region2: #{tpu_custom_call.1} parent=1 // pred_check
      _
    $region3: #{tpu_custom_call.1} parent=1 // pred_check_branch
      %13 = sbr.rel (0) target = $region5
    $region4: #{tpu_custom_call.1} parent=1 // pred_region
      _
    $region5: #{tpu_custom_call.1} parent=1 // pred_fallthru
      _
    // Predicated region
    $region6: #{tpu_custom_call.1} parent=1 // pred_check
      _
    $region7: #{tpu_custom_call.1} parent=1 // pred_check_branch
      %15 = sbr.rel (0) target = $region9
    $region8: #{tpu_custom_call.1} parent=1 // pred_region
      _
    $region9: #{tpu_custom_call.1} parent=1 // pred_fallthru
      _
    // Predicated region
    $region10: #{tpu_custom_call.1} parent=1 // pred_check
      _
    $region11: #{tpu_custom_call.1} parent=1 // pred_check_branch
      %17 = sbr.rel (0) target = $region13
    $region12: #{tpu_custom_call.1} parent=1 // pred_region
      %19 = vsyncadd [#allocation3], 0
      %s20 = sshll.u32 %s2, 4
      %s21 = int_to_ptr.hbm [resolvable:$true] %s20
      %s22 = sshll.u32 [#allocation2], 4
      %s23 = int_to_ptr.vmem [resolvable:$true] %s22
      %28 = dma.hbm_to_vmem [thread:$0]  %s21, 1024, %s23, [#allocation3], 64, 64, 4
    $region13: #{tpu_custom_call.1} parent=1 // pred_fallthru
      _
    // Predicated region
    $region14: #{tpu_custom_call.1} parent=1 // pred_check
      _
    $region15: #{tpu_custom_call.1} parent=1 // pred_check_branch
      %30 = sbr.rel (0) target = $region17
    $region16: #{tpu_custom_call.1} parent=1 // pred_region
      %32 = vsyncadd [#allocation6], 0
      %s33 = sshll.u32 %s3, 4
      %s34 = int_to_ptr.hbm [resolvable:$true] %s33
      %s35 = sshll.u32 [#allocation5], 4
      %s36 = int_to_ptr.vmem [resolvable:$true] %s35
      %41 = dma.hbm_to_vmem [thread:$0]  %s34, 1024, %s36, [#allocation6], 64, 64, 4
    $region17: #{tpu_custom_call.1} parent=1 // pred_fallthru
      _
    // Predicated region
    $region18: #{tpu_custom_call.1} parent=1 // pred_check
      _
    $region19: #{tpu_custom_call.1} parent=1 // pred_check_branch
      %43 = sbr.rel (0) target = $region21
    $region20: #{tpu_custom_call.1} parent=1 // pred_region
      %45 = dma.done [#allocation3], 1024
    $region21: #{tpu_custom_call.1} parent=1 // pred_fallthru
      _
    // Predicated region
    $region22: #{tpu_custom_call.1} parent=1 // pred_check
      _
    $region23: #{tpu_custom_call.1} parent=1 // pred_check_branch
      %47 = sbr.rel (0) target = $region25
    $region24: #{tpu_custom_call.1} parent=1 // pred_region
      %49 = dma.done [#allocation6], 1024
    $region25: #{tpu_custom_call.1} parent=1 // pred_fallthru
      _
    %v50 = vld [vmem:[%s0] sm:$0xff]
    %v51 = vld [vmem:[%s0 + $0x8] sm:$0xff]
    %v52 = vpack.c.bf16 %v51, %v50
    %v53 = vld [vmem:[#allocation2] sm:$0xf]
    %v54 = vld [vmem:[#allocation2 + $0x4] sm:$0xf]
    %v55 = vld [vmem:[#allocation2 + $0x8] sm:$0xf]
    %v56 = vld [vmem:[#allocation2 + $0xc] sm:$0xf]
    %v57 = vld [vmem:[#allocation2 + $0x10] sm:$0xf]
    %v58 = vld [vmem:[#allocation2 + $0x14] sm:$0xf]
    %v59 = vld [vmem:[#allocation2 + $0x18] sm:$0xf]
    %v60 = vld [vmem:[#allocation2 + $0x1c] sm:$0xf]
    %v61 = vld [vmem:[#allocation2 + $0x20] sm:$0xf]
    %v62 = vld [vmem:[#allocation2 + $0x24] sm:$0xf]
    %v63 = vld [vmem:[#allocation2 + $0x28] sm:$0xf]
    %v64 = vld [vmem:[#allocation2 + $0x2c] sm:$0xf]
    %v65 = vld [vmem:[#allocation2 + $0x30] sm:$0xf]
    %v66 = vld [vmem:[#allocation2 + $0x34] sm:$0xf]
    %v67 = vld [vmem:[#allocation2 + $0x38] sm:$0xf]
    %v68 = vld [vmem:[#allocation2 + $0x3c] sm:$0xf]
    %v85 = vunpack.c.l.b16 %v53
    %v86 = vunpack.c.l.b16 %v54
    %v87 = vunpack.c.l.b16 %v55
    %v88 = vunpack.c.l.b16 %v56
    %v89 = vunpack.c.l.b16 %v57
    %v90 = vunpack.c.l.b16 %v58
    %v91 = vunpack.c.l.b16 %v59
    %v92 = vunpack.c.l.b16 %v60
    %v93 = vunpack.c.l.b16 %v61
    %v94 = vunpack.c.l.b16 %v62
    %v95 = vunpack.c.l.b16 %v63
    %v96 = vunpack.c.l.b16 %v64
    %v97 = vunpack.c.l.b16 %v65
    %v98 = vunpack.c.l.b16 %v66
    %v99 = vunpack.c.l.b16 %v67
    %v100 = vunpack.c.l.b16 %v68
    %v101 = vpack.c.b16 %v86, %v85
    %v102 = vpack.c.b16 %v88, %v87
    %v103 = vpack.c.b16 %v90, %v89
    %v104 = vpack.c.b16 %v92, %v91
    %v105 = vpack.c.b16 %v94, %v93
    %v106 = vpack.c.b16 %v96, %v95
    %v107 = vpack.c.b16 %v98, %v97
    %v108 = vpack.c.b16 %v100, %v99
    %117 = vmatpush.bf16.msra.mxu0 %v108
    %118 = vmatpush.bf16.msra.mxu0 %v107
    %119 = vmatpush.bf16.msra.mxu0 %v106
    %120 = vmatpush.bf16.msra.mxu0 %v105
    %121 = vmatpush.bf16.msra.mxu0 %v104
    %122 = vmatpush.bf16.msra.mxu0 %v103
    %123 = vmatpush.bf16.msra.mxu0 %v102
    %124 = vmatpush.bf16.msra.mxu0 %v101
    %125 = vmatmul.bf16.gmra.mxu0 %v52
    %v126 = vpop.f32.mrf.mxu0
    %v127 = vadd.f32 0.0, %v126
    %v128 = vpop.f32.mrf.mxu0
    %v129 = vadd.f32 0.0, %v128
    %130 = vdwg.mxu0
    %v131 = vld [vmem:[%s1] sm:$0xff]
    %v132 = vld [vmem:[%s1 + $0x8] sm:$0xff]
    %134 = vset.pattern.permute.xlu0 0
    %135 = vperm.xlu0 %134, %v131
    %v136 = vpop.permute.xlu0 %135
    %139 = vset.pattern.permute.xlu0 0
    %140 = vperm.xlu0 %139, %v132
    %v141 = vpop.permute.xlu0 %140
    %v143 = vmul.f32 %v127, %v136
    %v144 = vmul.f32 %v129, %v141
    %vm145 = vcmp.ge.f32.partialorder %v143, 0.0
    %vm146 = vcmp.ge.f32.partialorder %v144, 0.0
    %v147 = vmul.f32 %v143, 0.2
    %v148 = vmul.f32 %v144, 0.2
    %v149 = vsel %vm145, %v143, %v147
    %v150 = vsel %vm146, %v144, %v148
    %v151 = vpack.c.bf16 %v150, %v149
    %v152 = vld [vmem:[#allocation5] sm:$0xf]
    %v153 = vld [vmem:[#allocation5 + $0x4] sm:$0xf]
    %v154 = vld [vmem:[#allocation5 + $0x8] sm:$0xf]
    %v155 = vld [vmem:[#allocation5 + $0xc] sm:$0xf]
    %v156 = vld [vmem:[#allocation5 + $0x10] sm:$0xf]
    %v157 = vld [vmem:[#allocation5 + $0x14] sm:$0xf]
    %v158 = vld [vmem:[#allocation5 + $0x18] sm:$0xf]
    %v159 = vld [vmem:[#allocation5 + $0x1c] sm:$0xf]
    %v160 = vld [vmem:[#allocation5 + $0x20] sm:$0xf]
    %v161 = vld [vmem:[#allocation5 + $0x24] sm:$0xf]
    %v162 = vld [vmem:[#allocation5 + $0x28] sm:$0xf]
    %v163 = vld [vmem:[#allocation5 + $0x2c] sm:$0xf]
    %v164 = vld [vmem:[#allocation5 + $0x30] sm:$0xf]
    %v165 = vld [vmem:[#allocation5 + $0x34] sm:$0xf]
    %v166 = vld [vmem:[#allocation5 + $0x38] sm:$0xf]
    %v167 = vld [vmem:[#allocation5 + $0x3c] sm:$0xf]
    %v184 = vunpack.c.l.b16 %v152
    %v185 = vunpack.c.l.b16 %v153
    %v186 = vunpack.c.l.b16 %v154
    %v187 = vunpack.c.l.b16 %v155
    %v188 = vunpack.c.l.b16 %v156
    %v189 = vunpack.c.l.b16 %v157
    %v190 = vunpack.c.l.b16 %v158
    %v191 = vunpack.c.l.b16 %v159
    %v192 = vunpack.c.l.b16 %v160
    %v193 = vunpack.c.l.b16 %v161
    %v194 = vunpack.c.l.b16 %v162
    %v195 = vunpack.c.l.b16 %v163
    %v196 = vunpack.c.l.b16 %v164
    %v197 = vunpack.c.l.b16 %v165
    %v198 = vunpack.c.l.b16 %v166
    %v199 = vunpack.c.l.b16 %v167
    %v200 = vpack.c.b16 %v185, %v184
    %v201 = vpack.c.b16 %v187, %v186
    %v202 = vpack.c.b16 %v189, %v188
    %v203 = vpack.c.b16 %v191, %v190
    %v204 = vpack.c.b16 %v193, %v192
    %v205 = vpack.c.b16 %v195, %v194
    %v206 = vpack.c.b16 %v197, %v196
    %v207 = vpack.c.b16 %v199, %v198
    %216 = vmatpush.bf16.msra.mxu0 %v207
    %217 = vmatpush.bf16.msra.mxu0 %v206
    %218 = vmatpush.bf16.msra.mxu0 %v205
    %219 = vmatpush.bf16.msra.mxu0 %v204
    %220 = vmatpush.bf16.msra.mxu0 %v203
    %221 = vmatpush.bf16.msra.mxu0 %v202
    %222 = vmatpush.bf16.msra.mxu0 %v201
    %223 = vmatpush.bf16.msra.mxu0 %v200
    %224 = vmatmul.bf16.gmra.mxu0 %v151
    %v225 = vpop.f32.mrf.mxu0
    %v226 = vadd.f32 0.0, %v225
    %v227 = vpop.f32.mrf.mxu0
    %v228 = vadd.f32 0.0, %v227
    %229 = vdwg.mxu0
    %230 = vst [vmem:[#allocation7] sm:$0xff] %v226
    %231 = vst [vmem:[#allocation7 + $0x8] sm:$0xff] %v228
    // Predicated region
    $region26: #{tpu_custom_call.1} parent=1 // pred_check
      _
    $region27: #{tpu_custom_call.1} parent=1 // pred_check_branch
      %233 = sbr.rel (0) target = $region29
    $region28: #{tpu_custom_call.1} parent=1 // pred_region
      %235 = vsyncadd [#allocation4], 0
      %s236 = sshll.u32 [#allocation7], 4
      %s237 = int_to_ptr.vmem [resolvable:$true] %s236
      %s238 = sshll.u32 %s4, 4
      %s239 = int_to_ptr.hbm [resolvable:$true] %s238
      %244 = dma.vmem_to_hbm [thread:$0]  %s237, 256, %s239, [#allocation4], 128, 128, 8
    $region29: #{tpu_custom_call.1} parent=1 // pred_fallthru
      _
    // Predicated region
    $region30: #{tpu_custom_call.1} parent=1 // pred_check
      _
    $region31: #{tpu_custom_call.1} parent=1 // pred_check_branch
      %246 = sbr.rel (0) target = $region33
    $region32: #{tpu_custom_call.1} parent=1 // pred_region
      %248 = dma.done [#allocation4], 256
    $region33: #{tpu_custom_call.1} parent=1 // pred_fallthru
      _
    %249 = vsyncpa [#allocation3], 1
    %250 = vsyncpa [#allocation6], 1
    %251 = vsyncpa [#allocation4], 1

</llo_original>
